<compile_context>
chip_gen: v7x
topology: tpu7x:2x2x1
jax: 0.10.0
libtpu: 0.0.40
codegen_flags: <defaults>
</compile_context>

<pallas_src>
import jax
import jax.numpy as jnp
from jax import lax
from jax.experimental import pallas as pl
from jax.experimental.pallas import tpu as pltpu


LANES = 128     # vreg lane width -> last dim of every block
ACC_ROWS = 64   # accumulator rows = 8 independent f32 vregs (VALU ILP + better rounding)


def _round_up(x, m):
    return ((x + m - 1) // m) * m


def _chip_config():
    """Per-generation block byte budget, scoped-VMEM limit and #TensorCores."""
    try:
        kind = jax.devices()[0].device_kind.lower()
    except Exception:
        kind = ""
    if "v7" in kind:
        # 2 TCs/chip, ~3.2 TB/s HBM, 64 MiB physical VMEM (32 MiB scoped default).
        return {"block_bytes": 6 << 20, "vmem_limit": 40 << 20, "n_par": 2}
    if "v6" in kind:
        # 1 TC, ~1.4 TB/s HBM, 128 MiB physical VMEM.
        return {"block_bytes": 8 << 20, "vmem_limit": 48 << 20, "n_par": 1}
    if "v5" in kind:
        # 1 TC, ~0.82 TB/s HBM, 128 MiB physical VMEM (16 MiB scoped default -> raise).
        return {"block_bytes": 4 << 20, "vmem_limit": 32 << 20, "n_par": 1}
    # Unknown chip: conservative.
    return {"block_bytes": 4 << 20, "vmem_limit": 40 << 20, "n_par": 1}


def _make_l1_kernel(block_rows, steps, valid_rows, exact_cover):
    """Kernel accumulating sum(|x - y|) of each block onto a resident (ACC_ROWS, 128) block."""

    def kernel(x_ref, y_ref, o_ref):
        i = pl.program_id(1)

        # Output block index is constant along the (sequential) reduction axis i,
        # so it stays resident in VMEM and doubles as the accumulator.
        @pl.when(i == 0)
        def _():
            o_ref[...] = jnp.zeros_like(o_ref)

        d = jnp.abs(x_ref[...].astype(jnp.float32) - y_ref[...].astype(jnp.float32))

        def fold(v):
            # Fold block rows onto ACC_ROWS independent accumulator rows:
            # pure VPU adds across 8 independent vreg chains (no XLU, no scalar path).
            o_ref[...] += v.reshape(-1, ACC_ROWS, LANES).sum(axis=0)

        if exact_cover:
            # Every block is fully in-bounds: no masking code emitted at all.
            fold(d)
        else:
            start_row = (pl.program_id(0) * steps + i) * block_rows
            needs_mask = start_row + block_rows > valid_rows

            @pl.when(jnp.logical_not(needs_mask))
            def _():
                fold(d)

            @pl.when(needs_mask)
            def _():
                # Only the overhang block(s) pay for the iota/compare/select.
                row_ids = start_row + lax.broadcasted_iota(jnp.int32, (block_rows, 1), 0)
                fold(jnp.where(row_ids < valid_rows, d, 0.0))

    return kernel


def modularized_l1_loss(pred, target):
    """Equivalent of ModularizedFunction(F.l1_loss)(pred, target) -> scalar mean |pred-target|."""
    assert pred.shape == target.shape, "pred/target shape mismatch"
    assert pred.dtype == target.dtype, "pred/target dtype mismatch (cast explicitly before the loss)"

    n_elem = pred.size
    if n_elem == 0:
        # Matches torch.nn.functional.l1_loss degenerating on empty input.
        return jnp.float32(jnp.nan)

    cfg = _chip_config()
    itemsize = jnp.dtype(pred.dtype).itemsize
    # Byte budget -> rows per block, aligned to the accumulator fold (covers the
    # (8/16/32, 128) sublane tiling of f32/bf16/int8 as well).
    max_block_rows = max(ACC_ROWS,
                         (cfg["block_bytes"] // (LANES * itemsize)) // ACC_ROWS * ACC_ROWS)

    x = pred.reshape(-1)
    y = target.reshape(-1)

    if n_elem % LANES == 0 and n_elem // LANES >= ACC_ROWS:
        # Hot path: pure bitcast reshape, zero extra HBM traffic; any ragged last
        # block is masked in-kernel.
        rows = n_elem // LANES
    else:
        # Tiny input or n_elem not a multiple of 128: pad with zeros (|0-0| = 0).
        # TODO(synk): for huge tensors whose element count is not a multiple of
        # 128 this jnp.pad materializes a copy; such shapes do not occur for the
        # NCHW loss tensors this module wraps.
        rows = _round_up(pl.cdiv(n_elem, LANES), ACC_ROWS)
        pad = rows * LANES - n_elem
        x = jnp.pad(x, (0, pad))
        y = jnp.pad(y, (0, pad))

    x2d = x.reshape(rows, LANES)
    y2d = y.reshape(rows, LANES)

    block_rows = min(max_block_rows, (rows // ACC_ROWS) * ACC_ROWS)
    total_blocks = pl.cdiv(rows, block_rows)
    n_par = cfg["n_par"] if total_blocks >= cfg["n_par"] else 1
    steps = pl.cdiv(total_blocks, n_par)
    # True iff every (p, i) grid point maps to a distinct, fully in-bounds block.
    exact_cover = (rows % block_rows == 0) and (total_blocks == n_par * steps)
    last_block = total_blocks - 1

    def in_map(p, i):
        blk = p * steps + i
        if not exact_cover:
            # Never issue a fully out-of-bounds DMA; duplicated reads of the last
            # block are zeroed by the in-kernel row mask.
            blk = jnp.minimum(blk, last_block)
        return (blk, 0)

    kernel = _make_l1_kernel(block_rows, steps, rows, exact_cover)

    partial = pl.pallas_call(
        kernel,
        out_shape=jax.ShapeDtypeStruct((n_par * ACC_ROWS, LANES), jnp.float32),
        grid_spec=pltpu.PrefetchScalarGridSpec(
            num_scalar_prefetch=0,
            grid=(n_par, steps),
            in_specs=[
                pl.BlockSpec((block_rows, LANES), in_map),
                pl.BlockSpec((block_rows, LANES), in_map),
            ],
            out_specs=pl.BlockSpec((ACC_ROWS, LANES), lambda p, i: (p, 0)),
        ),
        compiler_params=pltpu.CompilerParams(
            # Leading axis independent across TensorCores (v7x megacore); the
            # reduction axis is sequential because its output block is revisited.
            dimension_semantics=("parallel", "arbitrary"),
            vmem_limit_bytes=cfg["vmem_limit"],
        ),
        cost_estimate=pl.CostEstimate(
            flops=3 * n_elem,
            transcendentals=0,
            bytes_accessed=2 * n_elem * itemsize + n_par * ACC_ROWS * LANES * 4,
        ),
    )(x2d, y2d)

    # Tiny final cross-lane reduce and normalization by the TRUE element count.
    return jnp.sum(partial) / jnp.float32(n_elem)


class ModularizedFunction:
    """JAX analogue of the PyTorch ModularizedFunction: wraps an arbitrary forward_op."""

    def __init__(self, forward_op):
        self.forward_op = forward_op

    def __call__(self, *args, **kwargs):
        return self.forward_op(*args, **kwargs)


if __name__ == "__main__":
    key = jax.random.PRNGKey(0)
    k1, k2, k3, k4 = jax.random.split(key, 4)

    module = ModularizedFunction(modularized_l1_loss)

    # Primary check: NCHW inputs consistent with the PyTorch conv/loss conventions.
    pred = jax.random.normal(k1, (2, 4, 16, 16), dtype=jnp.float32)
    target = jax.random.normal(k2, (2, 4, 16, 16), dtype=jnp.float32)
    loss = module(pred, target)
    jax.block_until_ready(loss)
    ref = jnp.mean(jnp.abs(pred - target))
    assert jnp.allclose(loss, ref, rtol=1e-5, atol=1e-6), (loss, ref)

    # Secondary check: exercises the zero-copy multi-block path with a masked
    # (non-divisible) last block.
    pred2 = jax.random.normal(k3, (2, 3, 20, 128), dtype=jnp.float32)   # 120 rows of 128
    target2 = jax.random.normal(k4, (2, 3, 20, 128), dtype=jnp.float32)
    loss2 = module(pred2, target2)
    jax.block_until_ready(loss2)
    ref2 = jnp.mean(jnp.abs(pred2 - target2))
    assert jnp.allclose(loss2, ref2, rtol=1e-5, atol=1e-6), (loss2, ref2)

    print("KERNEL_OK")
</pallas_src>

<mosaic_0001>
module attributes {stable_mosaic.version = 11 : i64} {
  func.func @kernel(%arg0: i32, %arg1: i32, %arg2: memref<64x128xf32, #tpu.memory_space<vmem>>, %arg3: memref<64x128xf32, #tpu.memory_space<vmem>>, %arg4: memref<64x128xf32, #tpu.memory_space<vmem>>) attributes {dimension_semantics = [#tpu.dimension_semantics<parallel>, #tpu.dimension_semantics<arbitrary>], iteration_bounds = array<i64: 1, 1>, scalar_prefetch = 0 : i64, scratch_operands = 0 : i64, tpu.core_type = #tpu.core_type<tc>, window_params = [{transform_indices = @transform_0, window_bounds = array<i64: 64, 128>}, {transform_indices = @transform_1, window_bounds = array<i64: 64, 128>}, {transform_indices = @transform_2, window_bounds = array<i64: 64, 128>}]} {
    %c0_i32 = arith.constant 0 : i32
    %0 = arith.cmpi eq, %arg1, %c0_i32 : i32
    %1 = arith.extui %0 : i1 to i32
    %c0_i32_0 = arith.constant 0 : i32
    %2 = arith.cmpi ne, %1, %c0_i32_0 : i32
    scf.if %2 {
      %cst_8 = arith.constant 0.000000e+00 : f32
      %12 = vector.broadcast %cst_8 : f32 to vector<64x128xf32>
      %c0_9 = arith.constant 0 : index
      %c0_10 = arith.constant 0 : index
      %13 = vector.load %arg4[%c0_9, %c0_10] : memref<64x128xf32, #tpu.memory_space<vmem>>, vector<64x128xf32>
      tpu.vector_store %arg4[%c0_9, %c0_10], %12 {strides = array<i32>} : memref<64x128xf32, #tpu.memory_space<vmem>>, vector<64x128xf32>,
    } else {
    }
    %c0 = arith.constant 0 : index
    %c0_1 = arith.constant 0 : index
    %3 = vector.load %arg2[%c0, %c0_1] : memref<64x128xf32, #tpu.memory_space<vmem>>, vector<64x128xf32>
    %c0_2 = arith.constant 0 : index
    %c0_3 = arith.constant 0 : index
    %4 = vector.load %arg3[%c0_2, %c0_3] : memref<64x128xf32, #tpu.memory_space<vmem>>, vector<64x128xf32>
    %5 = arith.subf %3, %4 : vector<64x128xf32>
    %6 = math.absf %5 : vector<64x128xf32>
    %c0_4 = arith.constant 0 : index
    %c0_5 = arith.constant 0 : index
    %7 = vector.load %arg4[%c0_4, %c0_5] : memref<64x128xf32, #tpu.memory_space<vmem>>, vector<64x128xf32>
    %8 = vector.shape_cast %6 : vector<64x128xf32> to vector<1x64x128xf32>
    %cst = arith.constant dense<0.000000e+00> : vector<64x128xf32>
    %9 = vector.multi_reduction <add>, %8, %cst [0] : vector<1x64x128xf32> to vector<64x128xf32>
    %10 = arith.addf %7, %9 : vector<64x128xf32>
    %c0_6 = arith.constant 0 : index
    %c0_7 = arith.constant 0 : index
    %11 = vector.load %arg4[%c0_6, %c0_7] : memref<64x128xf32, #tpu.memory_space<vmem>>, vector<64x128xf32>
    tpu.vector_store %arg4[%c0_6, %c0_7], %10 {strides = array<i32>} : memref<64x128xf32, #tpu.memory_space<vmem>>, vector<64x128xf32>,
    return
  }
  func.func @transform_0(%arg0: i32, %arg1: i32) -> (i32, i32) {
    %c1_i32 = arith.constant 1 : i32
    %0 = arith.muli %arg0, %c1_i32 : i32
    %1 = arith.addi %0, %arg1 : i32
    %c0_i32 = arith.constant 0 : i32
    %c0_i32_0 = arith.constant 0 : i32
    return %1, %c0_i32 : i32, i32
  }
  func.func @transform_1(%arg0: i32, %arg1: i32) -> (i32, i32) {
    %c1_i32 = arith.constant 1 : i32
    %0 = arith.muli %arg0, %c1_i32 : i32
    %1 = arith.addi %0, %arg1 : i32
    %c0_i32 = arith.constant 0 : i32
    %c0_i32_0 = arith.constant 0 : i32
    return %1, %c0_i32 : i32, i32
  }
  func.func @transform_2(%arg0: i32, %arg1: i32) -> (i32, i32) {
    %c0_i32 = arith.constant 0 : i32
    %c0_i32_0 = arith.constant 0 : i32
    return %arg0, %c0_i32 : i32, i32
  }
}

</mosaic_0001>

<llo_original>
// kernel: tpu_custom_call.1
$region0: #{tpu_custom_call.1}
  #allocation0 [shape = 'u32[]', space=smem, size = 0x4, offset = 0x4, fixed_abs, tag = 'smem constant byte address 0x4 - core index']
  #allocation1 [shape = 'u32[144,128]{1,0:T(1,128)}', space=vmem, size = 0x12000, scoped, tag = 'internal scratch']
  %s0 = inlined_call_operand.hbm [shape: f32[64,128], index: 0, kind: input, shape index: {}]
  %s1 = inlined_call_operand.hbm [shape: f32[64,128], index: 1, kind: input, shape index: {}]
  %s2 = inlined_call_operand.hbm [shape: f32[64,128], index: 2, kind: output, shape index: {}]
  %s3 = sld [smem:[#allocation0]]
  $region30: #{tpu_custom_call.1} parent=0
    _
  %s5 = ssub.s32 1, %s3
  %s6 = scalar_select 0, %s5, %s3
  $region1: #{tpu_custom_call.1} parent=0
    #allocation2 [shape = 'u8[32768]{0}', space=vmem, size = 0x8000, scoped, tag = 'input window, operand 0, single buffered']
    #allocation3 [shape = 's32[1]{0}', space=sflag, size = 0x4, scoped, tag = 'scoped memory for tpu_custom_call.1']
    #allocation4 [shape = 's32[1]{0}', space=sflag, size = 0x4, scoped, tag = 'scoped memory for tpu_custom_call.1']
    #allocation5 [shape = 'u8[32768]{0}', space=vmem, size = 0x8000, scoped, tag = 'input window, operand 1, single buffered']
    #allocation6 [shape = 's32[1]{0}', space=sflag, size = 0x4, scoped, tag = 'scoped memory for tpu_custom_call.1']
    #allocation7 [shape = 'u8[32768]{0}', space=vmem, size = 0x8000, scoped, tag = 'output window, operand 0, single buffered']
    %7 = vsyncpa [#allocation3], 0
    %8 = vsyncpa [#allocation6], 0
    %9 = vsyncpa [#allocation4], 0
    // Predicated region
    $region2: #{tpu_custom_call.1} parent=1 // pred_check
      _
    $region3: #{tpu_custom_call.1} parent=1 // pred_check_branch
      %11 = sbr.rel (0) target = $region5
    $region4: #{tpu_custom_call.1} parent=1 // pred_region
      %s12 = sadd.s32 0, 0
      %s13 = smul.u32 8, %s12
      %s15 = ssub.s32 1024, 1024
      %16 = vsyncadd [#allocation3], %s15
      %s17 = smul.addr %s13, 128
      %s18 = scalar_lea.hbm %s0, %s17
      %s19 = sshll.u32 [#allocation2], 4
      %s20 = int_to_ptr.vmem [resolvable:$true] %s19
      %25 = dma.hbm_to_vmem [thread:$0]  %s18, 1024, %s20, [#allocation3], 128, 128, 8
    $region5: #{tpu_custom_call.1} parent=1 // pred_fallthru
      _
    // Predicated region
    $region6: #{tpu_custom_call.1} parent=1 // pred_check
      _
    $region7: #{tpu_custom_call.1} parent=1 // pred_check_branch
      %27 = sbr.rel (0) target = $region9
    $region8: #{tpu_custom_call.1} parent=1 // pred_region
      %s28 = sadd.s32 0, 0
      %s29 = smul.u32 8, %s28
      %s31 = ssub.s32 1024, 1024
      %32 = vsyncadd [#allocation6], %s31
      %s33 = smul.addr %s29, 128
      %s34 = scalar_lea.hbm %s1, %s33
      %s35 = sshll.u32 [#allocation5], 4
      %s36 = int_to_ptr.vmem [resolvable:$true] %s35
      %41 = dma.hbm_to_vmem [thread:$0]  %s34, 1024, %s36, [#allocation6], 128, 128, 8
    $region9: #{tpu_custom_call.1} parent=1 // pred_fallthru
      _
    // Predicated region
    $region10: #{tpu_custom_call.1} parent=1 // pred_check
      _
    $region11: #{tpu_custom_call.1} parent=1 // pred_check_branch
      %43 = sbr.rel (0) target = $region13
    $region12: #{tpu_custom_call.1} parent=1 // pred_region
      %44 = dma.done [#allocation3], 1024
    $region13: #{tpu_custom_call.1} parent=1 // pred_fallthru
      _
    // Predicated region
    $region14: #{tpu_custom_call.1} parent=1 // pred_check
      _
    $region15: #{tpu_custom_call.1} parent=1 // pred_check_branch
      %46 = sbr.rel (0) target = $region17
    $region16: #{tpu_custom_call.1} parent=1 // pred_region
      %47 = dma.done [#allocation6], 1024
    $region17: #{tpu_custom_call.1} parent=1 // pred_fallthru
      _
    %s48 = sadd.s32 0, 0
    %s49 = smul.u32 8, %s48
    %s50 = sadd.s32 0, 0
    %s51 = smul.u32 8, %s50
    %p52 = scmp.eq.s32.totalorder 0, 0
    // Predicated region
    $region18: #{tpu_custom_call.1} parent=1 // pred_check
      %p53 = pneg %p52
    $region19: #{tpu_custom_call.1} parent=1 // pred_check_branch
      %55 = sbr.rel (%p53) target = $region21
    $region20: #{tpu_custom_call.1} parent=1 // pred_region
      %56 = vst [vmem:[#allocation7] sm:$0xff] 0.0
      %57 = vst [vmem:[#allocation7 + $0x8] sm:$0xff] 0.0
      %58 = vst [vmem:[#allocation7 + $0x10] sm:$0xff] 0.0
      %59 = vst [vmem:[#allocation7 + $0x18] sm:$0xff] 0.0
      %60 = vst [vmem:[#allocation7 + $0x20] sm:$0xff] 0.0
      %61 = vst [vmem:[#allocation7 + $0x28] sm:$0xff] 0.0
      %62 = vst [vmem:[#allocation7 + $0x30] sm:$0xff] 0.0
      %63 = vst [vmem:[#allocation7 + $0x38] sm:$0xff] 0.0
    $region21: #{tpu_custom_call.1} parent=1 // pred_fallthru
      _
    %v64 = vld [vmem:[#allocation2] sm:$0xff]
    %v65 = vld [vmem:[#allocation2 + $0x8] sm:$0xff]
    %v66 = vld [vmem:[#allocation2 + $0x10] sm:$0xff]
    %v67 = vld [vmem:[#allocation2 + $0x18] sm:$0xff]
    %v68 = vld [vmem:[#allocation2 + $0x20] sm:$0xff]
    %v69 = vld [vmem:[#allocation2 + $0x28] sm:$0xff]
    %v70 = vld [vmem:[#allocation2 + $0x30] sm:$0xff]
    %v71 = vld [vmem:[#allocation2 + $0x38] sm:$0xff]
    %v72 = vld [vmem:[#allocation5] sm:$0xff]
    %v73 = vld [vmem:[#allocation5 + $0x8] sm:$0xff]
    %v74 = vld [vmem:[#allocation5 + $0x10] sm:$0xff]
    %v75 = vld [vmem:[#allocation5 + $0x18] sm:$0xff]
    %v76 = vld [vmem:[#allocation5 + $0x20] sm:$0xff]
    %v77 = vld [vmem:[#allocation5 + $0x28] sm:$0xff]
    %v78 = vld [vmem:[#allocation5 + $0x30] sm:$0xff]
    %v79 = vld [vmem:[#allocation5 + $0x38] sm:$0xff]
    %v80 = vsub.f32 %v64, %v72
    %v81 = vsub.f32 %v65, %v73
    %v82 = vsub.f32 %v66, %v74
    %v83 = vsub.f32 %v67, %v75
    %v84 = vsub.f32 %v68, %v76
    %v85 = vsub.f32 %v69, %v77
    %v86 = vsub.f32 %v70, %v78
    %v87 = vsub.f32 %v71, %v79
    %v88 = vand.u32 2147483647, %v80
    %v89 = vand.u32 2147483647, %v81
    %v90 = vand.u32 2147483647, %v82
    %v91 = vand.u32 2147483647, %v83
    %v92 = vand.u32 2147483647, %v84
    %v93 = vand.u32 2147483647, %v85
    %v94 = vand.u32 2147483647, %v86
    %v95 = vand.u32 2147483647, %v87
    %v96 = vld [vmem:[#allocation7] sm:$0xff]
    %v97 = vld [vmem:[#allocation7 + $0x8] sm:$0xff]
    %v98 = vld [vmem:[#allocation7 + $0x10] sm:$0xff]
    %v99 = vld [vmem:[#allocation7 + $0x18] sm:$0xff]
    %v100 = vld [vmem:[#allocation7 + $0x20] sm:$0xff]
    %v101 = vld [vmem:[#allocation7 + $0x28] sm:$0xff]
    %v102 = vld [vmem:[#allocation7 + $0x30] sm:$0xff]
    %v103 = vld [vmem:[#allocation7 + $0x38] sm:$0xff]
    %v104 = vadd.f32 %v88, 0.0
    %v105 = vadd.f32 %v89, 0.0
    %v106 = vadd.f32 %v90, 0.0
    %v107 = vadd.f32 %v91, 0.0
    %v108 = vadd.f32 %v92, 0.0
    %v109 = vadd.f32 %v93, 0.0
    %v110 = vadd.f32 %v94, 0.0
    %v111 = vadd.f32 %v95, 0.0
    %v112 = vadd.f32 %v96, %v104
    %v113 = vadd.f32 %v97, %v105
    %v114 = vadd.f32 %v98, %v106
    %v115 = vadd.f32 %v99, %v107
    %v116 = vadd.f32 %v100, %v108
    %v117 = vadd.f32 %v101, %v109
    %v118 = vadd.f32 %v102, %v110
    %v119 = vadd.f32 %v103, %v111
    %120 = vst [vmem:[#allocation7] sm:$0xff] %v112
    %121 = vst [vmem:[#allocation7 + $0x8] sm:$0xff] %v113
    %122 = vst [vmem:[#allocation7 + $0x10] sm:$0xff] %v114
    %123 = vst [vmem:[#allocation7 + $0x18] sm:$0xff] %v115
    %124 = vst [vmem:[#allocation7 + $0x20] sm:$0xff] %v116
    %125 = vst [vmem:[#allocation7 + $0x28] sm:$0xff] %v117
    %126 = vst [vmem:[#allocation7 + $0x30] sm:$0xff] %v118
    %127 = vst [vmem:[#allocation7 + $0x38] sm:$0xff] %v119
    // Predicated region
    $region22: #{tpu_custom_call.1} parent=1 // pred_check
      _
    $region23: #{tpu_custom_call.1} parent=1 // pred_check_branch
      %129 = sbr.rel (0) target = $region25
    $region24: #{tpu_custom_call.1} parent=1 // pred_region
      %s131 = ssub.s32 1024, 1024
      %132 = vsyncadd [#allocation4], %s131
      %s133 = sshll.u32 [#allocation7], 4
      %s134 = int_to_ptr.vmem [resolvable:$true] %s133
      %139 = dma.vmem_to_hbm [thread:$0]  %s134, 1024, %s2, [#allocation4], 128, 128, 8
    $region25: #{tpu_custom_call.1} parent=1 // pred_fallthru
      _
    // Predicated region
    $region26: #{tpu_custom_call.1} parent=1 // pred_check
      _
    $region27: #{tpu_custom_call.1} parent=1 // pred_check_branch
      %141 = sbr.rel (0) target = $region29
    $region28: #{tpu_custom_call.1} parent=1 // pred_region
      %142 = dma.done [#allocation4], 1024
    $region29: #{tpu_custom_call.1} parent=1 // pred_fallthru
      _
    %143 = vsyncpa [#allocation3], 1
    %144 = vsyncpa [#allocation6], 1
    %145 = vsyncpa [#allocation4], 1

</llo_original>
